<compile_context>
chip_gen: v7x
topology: tpu7x:2x2x1
jax: 0.10.0
libtpu: 0.0.40
codegen_flags: <defaults>
</compile_context>

<pallas_src>
import functools

import jax
import jax.numpy as jnp
from jax.experimental import pallas as pl
from jax.experimental.pallas import tpu as pltpu


def _scale_from_window_sum(acc, local_size, alpha, beta):
    """(window_sum/local_size * alpha + 1)**(-beta), without divide or pow."""
    u = acc * (alpha / float(local_size)) + 1.0
    if beta == 0.75:
        # u**(-3/4) = rsqrt(u) * sqrt(rsqrt(u)) : two EUP ops.
        t = jax.lax.rsqrt(u)
        return t * jnp.sqrt(t)
    # u >= 1 so log is safe.
    return jnp.exp((-beta) * jnp.log(u))


def _lrn_roll_kernel(x_ref, o_ref, *, local_size, alpha, beta):
    # x_ref / o_ref: (B, C, T) -- batch block, channels on sublanes, spatial on lanes.
    B, C, T = x_ref.shape
    xf = x_ref[...].astype(jnp.float32).reshape(B * C, T)
    sq = xf * xf
    if local_size == 1:
        acc = sq
    else:
        pad = (local_size - 1) // 2
        row = jax.lax.broadcasted_iota(jnp.int32, (B * C, 1), 0)
        ch = row % C  # channel index of each batch-flattened row
        acc = sq
        for k in range(-pad, pad + 1):
            if k == 0:
                continue
            # shifted[r] = sq[r + k] (modular). Mask keeps only in-range channels of
            # the SAME batch element (matches AvgPool3d zero padding); invalid rows
            # contribute 0 so modular wrap across batch boundaries is harmless.
            shifted = pltpu.roll(sq, shift=(-k) % (B * C), axis=0)
            valid = jnp.logical_and(ch + k >= 0, ch + k < C)
            acc = acc + jnp.where(valid, shifted, 0.0)
    scale = _scale_from_window_sum(acc, local_size, alpha, beta)
    o_ref[...] = (xf * scale).reshape(B, C, T).astype(o_ref.dtype)


def _lrn_band_kernel(band_ref, x_ref, o_ref, *, local_size, alpha, beta):
    # x_ref / o_ref: (C, T); band_ref: (C, C) resident banded ones matrix.
    xf = x_ref[...].astype(jnp.float32)
    sq = xf * xf
    # (band @ sq)[c] = sum of sq over channels [c-pad, c+pad] (zero outside range).
    acc = jnp.dot(band_ref[...], sq, preferred_element_type=jnp.float32)
    scale = _scale_from_window_sum(acc, local_size, alpha, beta)
    o_ref[...] = (xf * scale).astype(o_ref.dtype)


def lrn_pallas(x, local_size=1, alpha=1.0, beta=0.75, *,
               tile_hw=2048, target_block_bytes=512 * 1024):
    """LRN with ACROSS_CHANNELS=True. x: (N, C, H, W), odd local_size."""
    # TODO(synk): ACROSS_CHANNELS=False branch (spatial AvgPool2d) is not implemented;
    # only the module-default ACROSS_CHANNELS=True path is covered.
    assert local_size % 2 == 1, "only odd local_size matches the module's padding"
    assert tile_hw % 128 == 0
    local_size = int(local_size)
    alpha = float(alpha)
    beta = float(beta)  # keep the beta==0.75 trace-time branch honest

    N, C, H, W = x.shape
    hw = H * W
    itemsize = jnp.dtype(x.dtype).itemsize

    # Lane tile: multiple of 128. No wrapper-side pad / slice -- Pallas masks the
    # ragged tail block, avoiding extra HBM passes for unaligned H*W.
    hw_ceil = ((hw + 127) // 128) * 128
    T = min(tile_hw, hw_ceil)
    num_tiles = pl.cdiv(hw, T)

    x_flat = x.reshape(N, C, hw)  # free (contiguous) reshape
    common = dict(
        out_shape=jax.ShapeDtypeStruct((N, C, hw), x.dtype),
        compiler_params=pltpu.CompilerParams(
            dimension_semantics=("parallel", "parallel"),
            vmem_limit_bytes=32 * 1024 * 1024,
        ),
    )

    if local_size <= 7:
        # O(local_size) roll-based window sum; block several batch elements per step
        # when C*HW is small so each grid step moves a reasonably sized tile.
        nb = max(1, min(N, target_block_bytes // max(1, C * T * itemsize)))
        if pl.cdiv(N, nb) * num_tiles < 2 and N * num_tiles >= 2:
            nb = pl.cdiv(N, 2)  # keep >= 2 grid points so both v7x TensorCores get work
        out_flat = pl.pallas_call(
            functools.partial(_lrn_roll_kernel,
                              local_size=local_size, alpha=alpha, beta=beta),
            grid_spec=pltpu.PrefetchScalarGridSpec(
                num_scalar_prefetch=0,
                grid=(pl.cdiv(N, nb), num_tiles),
                in_specs=[pl.BlockSpec((nb, C, T), lambda n, t: (n, 0, t))],
                out_specs=pl.BlockSpec((nb, C, T), lambda n, t: (n, 0, t)),
            ),
            **common,
        )(x_flat)
    else:
        # Large window: dense MXU matmul against a banded ones matrix, built once in
        # the wrapper and kept VMEM-resident (constant block index -> single DMA).
        pad = (local_size - 1) // 2
        ii = jnp.arange(C)[:, None]
        jj = jnp.arange(C)[None, :]
        band = (jnp.abs(ii - jj) <= pad).astype(jnp.float32)
        out_flat = pl.pallas_call(
            functools.partial(_lrn_band_kernel,
                              local_size=local_size, alpha=alpha, beta=beta),
            grid_spec=pltpu.PrefetchScalarGridSpec(
                num_scalar_prefetch=0,
                grid=(N, num_tiles),
                in_specs=[pl.BlockSpec((C, C), lambda n, t: (0, 0)),
                          pl.BlockSpec((None, C, T), lambda n, t: (n, 0, t))],
                out_specs=pl.BlockSpec((None, C, T), lambda n, t: (n, 0, t)),
            ),
            **common,
        )(band, x_flat)

    return out_flat.reshape(N, C, H, W)


def _lrn_ref(x, local_size=1, alpha=1.0, beta=0.75):
    # Pure-JAX reference mirroring the PyTorch forward (ACROSS_CHANNELS=True).
    pad = (local_size - 1) // 2
    sq = x.astype(jnp.float32) ** 2
    sq_p = jnp.pad(sq, ((0, 0), (pad, local_size - 1 - pad), (0, 0), (0, 0)))
    C = x.shape[1]
    acc = sum(sq_p[:, k:k + C] for k in range(local_size))
    div = (acc / local_size * alpha + 1.0) ** beta
    return (x.astype(jnp.float32) / div).astype(x.dtype)


if __name__ == "__main__":
    key = jax.random.PRNGKey(0)

    # (shape, local_size): module defaults first, then configs exercising the roll-based
    # window sum, the ragged (non-128-multiple) spatial tail, batch-blocked tiles, and
    # the resident-band MXU path.
    configs = [
        ((2, 4, 16, 16), 1),   # module defaults (local_size=1)
        ((2, 8, 16, 16), 3),   # roll-based window sum, aligned H*W
        ((2, 8, 10, 13), 5),   # roll path + ragged spatial tail (no wrapper pad/slice)
        ((8, 8, 8, 8), 3),     # batch-blocked (nb > 1) tiles, tiny spatial
        ((2, 16, 12, 12), 9),  # large window -> resident banded-matrix MXU path
    ]

    for idx, (shape, ls) in enumerate(configs):
        k = jax.random.fold_in(key, idx)
        x = jax.random.normal(k, shape, dtype=jnp.float32)

        out = jax.block_until_ready(lrn_pallas(x, local_size=ls, alpha=1.0, beta=0.75))
        ref = _lrn_ref(x, local_size=ls, alpha=1.0, beta=0.75)
        assert jnp.allclose(out, ref, atol=1e-5, rtol=1e-5), (
            f"mismatch vs reference for shape={shape}, local_size={ls}"
        )

    print("KERNEL_OK")
</pallas_src>

<mosaic_0001>
module attributes {stable_mosaic.version = 11 : i64} {
  func.func @_lrn_roll_kernel(%arg0: i32, %arg1: i32, %arg2: memref<1x4x256xf32, #tpu.memory_space<vmem>>, %arg3: memref<1x4x256xf32, #tpu.memory_space<vmem>>) attributes {dimension_semantics = [#tpu.dimension_semantics<parallel>, #tpu.dimension_semantics<parallel>], iteration_bounds = array<i64: 2, 1>, scalar_prefetch = 0 : i64, scratch_operands = 0 : i64, tpu.core_type = #tpu.core_type<tc>, window_params = [{transform_indices = @transform_0, window_bounds = array<i64: 1, 4, 256>}, {transform_indices = @transform_1, window_bounds = array<i64: 1, 4, 256>}]} {
    %c0 = arith.constant 0 : index
    %c0_0 = arith.constant 0 : index
    %c0_1 = arith.constant 0 : index
    %0 = vector.load %arg2[%c0, %c0_0, %c0_1] : memref<1x4x256xf32, #tpu.memory_space<vmem>>, vector<1x4x256xf32>
    %1 = vector.shape_cast %0 : vector<1x4x256xf32> to vector<4x256xf32>
    %2 = arith.mulf %1, %1 : vector<4x256xf32>
    %cst = arith.constant 1.000000e+00 : f32
    %3 = vector.broadcast %cst : f32 to vector<4x256xf32>
    %4 = arith.mulf %2, %3 : vector<4x256xf32>
    %cst_2 = arith.constant 1.000000e+00 : f32
    %5 = vector.broadcast %cst_2 : f32 to vector<4x256xf32>
    %6 = arith.addf %4, %5 : vector<4x256xf32>
    %7 = math.rsqrt %6 : vector<4x256xf32>
    %8 = math.sqrt %7 : vector<4x256xf32>
    %9 = arith.mulf %7, %8 : vector<4x256xf32>
    %10 = arith.mulf %1, %9 : vector<4x256xf32>
    %11 = vector.shape_cast %10 : vector<4x256xf32> to vector<1x4x256xf32>
    %c0_3 = arith.constant 0 : index
    %c0_4 = arith.constant 0 : index
    %c0_5 = arith.constant 0 : index
    %12 = vector.load %arg3[%c0_3, %c0_4, %c0_5] : memref<1x4x256xf32, #tpu.memory_space<vmem>>, vector<1x4x256xf32>
    tpu.vector_store %arg3[%c0_3, %c0_4, %c0_5], %11 {strides = array<i32>} : memref<1x4x256xf32, #tpu.memory_space<vmem>>, vector<1x4x256xf32>,
    return
  }
  func.func @transform_0(%arg0: i32, %arg1: i32) -> (i32, i32, i32) {
    %c0_i32 = arith.constant 0 : i32
    %c0_i32_0 = arith.constant 0 : i32
    return %arg0, %c0_i32, %arg1 : i32, i32, i32
  }
  func.func @transform_1(%arg0: i32, %arg1: i32) -> (i32, i32, i32) {
    %c0_i32 = arith.constant 0 : i32
    %c0_i32_0 = arith.constant 0 : i32
    return %arg0, %c0_i32, %arg1 : i32, i32, i32
  }
}

</mosaic_0001>

<llo_original>
// kernel: tpu_custom_call.1
$region0: #{tpu_custom_call.1}
  #allocation0 [shape = 'u32[]', space=smem, size = 0x4, offset = 0x4, fixed_abs, tag = 'smem constant byte address 0x4 - core index']
  #allocation1 [shape = 'u32[144,128]{1,0:T(1,128)}', space=vmem, size = 0x12000, scoped, tag = 'internal scratch']
  %s0 = inlined_call_operand.hbm [shape: f32[2,4,256], index: 0, kind: input, shape index: {}]
  %s1 = inlined_call_operand.hbm [shape: f32[2,4,256], index: 1, kind: output, shape index: {}]
  %s2 = sld [smem:[#allocation0]]
  $region41: #{tpu_custom_call.1} parent=0
    _
  %s4 = ssub.s32 1, %s2
  %s5 = scalar_select 0, %s4, %s2
  $region1: #{tpu_custom_call.1} parent=0
    #allocation2 [shape = 'u8[8192]{0}', space=vmem, size = 0x2000, scoped, tag = 'input window, operand 0']
    #allocation3 [shape = 's32[2]{0}', space=sflag, size = 0x8, scoped, tag = 'scoped memory for tpu_custom_call.1']
    #allocation4 [shape = 's32[2]{0}', space=sflag, size = 0x8, scoped, tag = 'scoped memory for tpu_custom_call.1']
    #allocation5 [shape = 'u8[8192]{0}', space=vmem, size = 0x2000, scoped, tag = 'output window, operand 0']
    %6 = vsyncpa [#allocation3], 0
    %s7 = scalar_lea.sflag [#allocation3], 1
    %8 = vsyncpa %s7, 0
    %9 = vsyncpa [#allocation4], 0
    %s10 = scalar_lea.sflag [#allocation4], 1
    %11 = vsyncpa %s10, 0
    loop: start=0, step=1, limit=4
    $region2: #{tpu_custom_call.1} parent=1 // loop_pre_header
      _
    $region3: #{tpu_custom_call.1} parent=1 // loop_header
      %s13 = sphi 0, %s17
      %p14 = scmp.ge.s32.totalorder %s13, 4
      %s20 = sphi 0, %s32
      %s21 = sphi 0, %s28
      %s22 = sphi 0, %s20
      %s23 = sphi 0, %s21
      %s24 = sphi 0, %s22
      %s25 = sphi 0, %s23
      %s37 = sphi 0, %s39
      %s40 = sphi 0, %s37
      %s41 = sphi 0, %s40
      %s57 = sphi 0, %s41
      %s65 = sphi 0, %s67
      %s68 = sphi 0, %s65
      %s69 = sphi 0, %s68
      %s85 = sphi 0, %s69
    $region4: #{tpu_custom_call.1} parent=1 // loop_header_branch
      %16 = sbr.rel (%p14) target = $region8
    $region5: #{tpu_custom_call.1} parent=1 // loop_body
      %s18 = ssub.s32 %s13, 1
      %s19 = ssub.s32 %s13, 2
      %s26 = sadd.s32 1, %s21
      %p27 = scmp.ge.s32.totalorder %s26, 1
      %s28 = scalar_select %p27, 0, %s26
      %s29 = sadd.s32 1, %s20
      %s30 = scalar_select %p27, %s29, %s20
      %p31 = scmp.ge.s32.totalorder %s30, 2
      %s32 = scalar_select %p31, 0, %s30
      %s33 = ssub.s32 %s20, %s32
      %s34 = ssub.s32 %s21, %s28
      %s35 = sor.u32 %s33, %s34
      %p36 = scmp.eq.s32.totalorder %s35, 0
      %s38 = sadd.s32 %s37, 1
      %s39 = scalar_select %p36, %s37, %s38
      %p42 = pneg %p36
      %p43 = scmp.eq.s32.totalorder %s13, 1
      %p44 = por %p42, %p43
      %p45 = scmp.ne.s32.totalorder %s37, %s40
      %p46 = scmp.eq.s32.totalorder %s13, 0
      %p47 = por %p45, %p46
      %p48 = scmp.ne.s32.totalorder %s37, %s40
      %p49 = scmp.eq.s32.totalorder %s18, 1
      %p50 = por %p48, %p49
      %p51 = scmp.ne.s32.totalorder %s40, %s41
      %p52 = scmp.eq.s32.totalorder %s18, 0
      %p53 = por %p51, %p52
      %p54 = scmp.ne.s32.totalorder %s40, %s41
      %p55 = scmp.eq.s32.totalorder %s19, 1
      %p56 = por %p54, %p55
      %p58 = scmp.ne.s32.totalorder %s41, %s57
      %p59 = scmp.eq.s32.totalorder %s19, 0
      %p60 = por %p58, %p59
      %s61 = ssub.s32 %s20, %s32
      %s62 = ssub.s32 %s21, %s28
      %s63 = sor.u32 %s61, %s62
      %p64 = scmp.eq.s32.totalorder %s63, 0
      %s66 = sadd.s32 %s65, 1
      %s67 = scalar_select %p64, %s65, %s66
      %p70 = pneg %p64
      %p71 = scmp.eq.s32.totalorder %s13, 1
      %p72 = por %p70, %p71
      %p73 = scmp.ne.s32.totalorder %s65, %s68
      %p74 = scmp.eq.s32.totalorder %s13, 0
      %p75 = por %p73, %p74
      %p76 = scmp.ne.s32.totalorder %s65, %s68
      %p77 = scmp.eq.s32.totalorder %s18, 1
      %p78 = por %p76, %p77
      %p79 = scmp.ne.s32.totalorder %s68, %s69
      %p80 = scmp.eq.s32.totalorder %s18, 0
      %p81 = por %p79, %p80
      %p82 = scmp.ne.s32.totalorder %s68, %s69
      %p83 = scmp.eq.s32.totalorder %s19, 1
      %p84 = por %p82, %p83
      %p86 = scmp.ne.s32.totalorder %s69, %s85
      %p87 = scmp.eq.s32.totalorder %s19, 0
      %p88 = por %p86, %p87
      %p89 = scmp.le.s32.totalorder 1, %s13
      %p90 = scmp.lt.s32.totalorder %s13, 3
      %p91 = pnand %p89, %p90
      %p92 = pneg %p91
      // Predicated region
      $region9: #{tpu_custom_call.1} parent=5 // pred_check
        _
      $region10: #{tpu_custom_call.1} parent=5 // pred_check_branch
        %94 = sbr.rel (%p91) target = $region12
      $region11: #{tpu_custom_call.1} parent=5 // pred_region
        %s95 = ssub.s32 %s13, 1
      $region12: #{tpu_custom_call.1} parent=5 // pred_fallthru
        _
      %p96 = scmp.lt.s32.totalorder %s13, 2
      // Predicated region
      $region13: #{tpu_custom_call.1} parent=5 // pred_check
        %p97 = pneg %p96
      $region14: #{tpu_custom_call.1} parent=5 // pred_check_branch
        %99 = sbr.rel (%p97) target = $region16
      $region15: #{tpu_custom_call.1} parent=5 // pred_region
        // Predicated region
        $region17: #{tpu_custom_call.1} parent=15 // pred_check
          %p100 = pneg %p47
        $region18: #{tpu_custom_call.1} parent=15 // pred_check_branch
          %102 = sbr.rel (%p100) target = $region20
        $region19: #{tpu_custom_call.1} parent=15 // pred_region
          %s103 = sand.u32 %s37, 1
          %s104 = scalar_lea.sflag [#allocation3], %s103
          %s105 = sand.u32 %s37, 1
          %s106 = smul.addr %s105, 8
          %s107 = scalar_lea.vmem [#allocation2], %s106
          %s108 = smul.u32 2, %s21
          %s110 = ssub.s32 128, 128
          %111 = vsyncadd %s104, %s110
          %s112 = smul.addr %s20, 2
          %s113 = sadd.s32 %s108, %s112
          %s114 = smul.addr %s113, 64
          %s115 = scalar_lea.hbm %s0, %s114
          %s117 = sshll.u32 %s107, 4
          %s118 = int_to_ptr.vmem [resolvable:$true] %s117
          %120 = dma.hbm_to_vmem [thread:$0]  %s115, 128, %s118, %s104
        $region20: #{tpu_custom_call.1} parent=15 // pred_fallthru
          _
      $region16: #{tpu_custom_call.1} parent=5 // pred_fallthru
        _
      %p121 = scmp.le.s32.totalorder 1, %s13
      %p122 = scmp.lt.s32.totalorder %s13, 3
      %p123 = pnand %p121, %p122
      %p124 = pneg %p123
      // Predicated region
      $region21: #{tpu_custom_call.1} parent=5 // pred_check
        _
      $region22: #{tpu_custom_call.1} parent=5 // pred_check_branch
        %126 = sbr.rel (%p123) target = $region24
      $region23: #{tpu_custom_call.1} parent=5 // pred_region
        %s127 = ssub.s32 %s13, 1
        %s128 = sand.u32 %s40, 1
        %s129 = scalar_lea.sflag [#allocation3], %s128
        %s130 = sand.u32 %s40, 1
        %s131 = smul.addr %s130, 8
        %s132 = scalar_lea.vmem [#allocation2], %s131
        // Predicated region
        $region25: #{tpu_custom_call.1} parent=23 // pred_check
          %p133 = pneg %p53
        $region26: #{tpu_custom_call.1} parent=23 // pred_check_branch
          %135 = sbr.rel (%p133) target = $region28
        $region27: #{tpu_custom_call.1} parent=23 // pred_region
          %136 = dma.done %s129, 128
        $region28: #{tpu_custom_call.1} parent=23 // pred_fallthru
          _
        %s137 = sand.u32 %s40, 1
        %s138 = scalar_lea.sflag [#allocation3], %s137
        %s139 = sand.u32 %s40, 1
        %s140 = smul.addr %s139, 8
        %s141 = scalar_lea.vmem [#allocation2], %s140
        %p142 = pneg %p53
        %p143 = pneg %p50
        %p144 = pneg %p81
        %p145 = pneg %p78
        %s146 = sand.u32 %s68, 1
        %s147 = scalar_lea.sflag [#allocation4], %s146
        %s148 = sand.u32 %s68, 1
        %s149 = smul.addr %s148, 8
        %s150 = scalar_lea.vmem [#allocation5], %s149
        %s151 = smul.u32 2, %s23
        %s152 = smul.u32 2, %s23
        %v153 = vld [vmem:[%s132] sm:$0xff]
        %v154 = vmul.f32 %v153, %v153
        %v155 = vadd.f32 %v154, 1.0
        %v156 = vrsqrt.pop %v155
        %v157 = vrsqrt.pop %v156
        %v158 = vmul.f32 %v156, %v157
        %vm159 = vcmp.eq.f32.partialorder %v156, inf
        %v160 = vsel %vm159, %v156, %v158
        %vm161 = vcmp.eq.f32.partialorder %v156, 0.0
        %v162 = vand.u32 %v156, 2147483648
        %v163 = vsel %vm161, %v162, %v160
        %v164 = vmul.f32 %v156, %v163
        %v165 = vmul.f32 %v153, %v164
        %166 = vst [vmem:[%s150] sm:$0xff] %v165
        %s167 = sand.u32 %s68, 1
        %s168 = scalar_lea.sflag [#allocation4], %s167
        %s169 = sand.u32 %s68, 1
        %s170 = smul.addr %s169, 8
        %s171 = scalar_lea.vmem [#allocation5], %s170
        // Predicated region
        $region29: #{tpu_custom_call.1} parent=23 // pred_check
          %p172 = pneg %p78
        $region30: #{tpu_custom_call.1} parent=23 // pred_check_branch
          %174 = sbr.rel (%p172) target = $region32
        $region31: #{tpu_custom_call.1} parent=23 // pred_region
          %s175 = smul.u32 2, %s23
          %s177 = ssub.s32 128, 128
          %178 = vsyncadd %s168, %s177
          %s179 = smul.addr %s22, 2
          %s180 = sadd.s32 %s175, %s179
          %s181 = smul.addr %s180, 64
          %s182 = scalar_lea.hbm %s1, %s181
          %s184 = sshll.u32 %s171, 4
          %s185 = int_to_ptr.vmem [resolvable:$true] %s184
          %187 = dma.vmem_to_hbm [thread:$0]  %s185, 128, %s182, %s168
        $region32: #{tpu_custom_call.1} parent=23 // pred_fallthru
          _
      $region24: #{tpu_custom_call.1} parent=5 // pred_fallthru
        _
      %p188 = scmp.le.s32.totalorder 2, %s13
      // Predicated region
      $region33: #{tpu_custom_call.1} parent=5 // pred_check
        %p189 = pneg %p188
      $region34: #{tpu_custom_call.1} parent=5 // pred_check_branch
        %191 = sbr.rel (%p189) target = $region36
      $region35: #{tpu_custom_call.1} parent=5 // pred_region
        %s192 = ssub.s32 %s13, 2
        // Predicated region
        $region37: #{tpu_custom_call.1} parent=35 // pred_check
          %p193 = pneg %p84
        $region38: #{tpu_custom_call.1} parent=35 // pred_check_branch
          %195 = sbr.rel (%p193) target = $region40
        $region39: #{tpu_custom_call.1} parent=35 // pred_region
          %s196 = sand.u32 %s69, 1
          %s197 = scalar_lea.sflag [#allocation4], %s196
          %s198 = sand.u32 %s69, 1
          %s199 = smul.addr %s198, 8
          %s200 = scalar_lea.vmem [#allocation5], %s199
          %201 = dma.done %s197, 128
        $region40: #{tpu_custom_call.1} parent=35 // pred_fallthru
          _
      $region36: #{tpu_custom_call.1} parent=5 // pred_fallthru
        _
    $region6: #{tpu_custom_call.1} parent=1 // loop_footer
      %s17 = sadd.s32 1, %s13
    $region7: #{tpu_custom_call.1} parent=1 // loop_footer_branch
      %12 = sbr.rel target = $region3
    $region8: #{tpu_custom_call.1} parent=1 // loop_exit
      _
    %202 = vsyncpa [#allocation3], 1
    %s203 = scalar_lea.sflag [#allocation3], 1
    %204 = vsyncpa %s203, 1
    %205 = vsyncpa [#allocation4], 1
    %s206 = scalar_lea.sflag [#allocation4], 1
    %207 = vsyncpa %s206, 1

</llo_original>
